<compile_context>
chip_gen: v6e
topology: v6e:2x2x1
jax: 0.10.0
libtpu: 0.0.40
codegen_flags: <defaults>
</compile_context>

<pallas_src>
import jax
import jax.numpy as jnp
from jax.experimental import pallas as pl
from jax.experimental.pallas import tpu as pltpu

BN_EPS = 1e-5
LANE = 128


def simple_model_kernel(x_ref, w1_ref, params_ref, w2_ref, o_ref):
    Hp = w1_ref.shape[1]
    Op = w2_ref.shape[1]

    # ---- layer1: Linear(input -> hidden) on the MXU; bias omitted (it is
    #      cancelled exactly by the train-mode BN mean subtraction) ----
    x = x_ref[...]                                                    # (B, I)
    h = jnp.dot(x, w1_ref[...], preferred_element_type=jnp.float32)   # (B, Hp)

    # ---- bn1: train-mode BatchNorm1d, one-pass batch stats (biased var) ----
    inv_b = 1.0 / h.shape[0]
    s1 = jnp.sum(h, axis=0, keepdims=True)                            # (1, Hp)
    s2 = jnp.sum(h * h, axis=0, keepdims=True)                        # (1, Hp)
    mean = s1 * inv_b
    var = jnp.maximum(s2 * inv_b - mean * mean, 0.0)   # clamp: one-pass cancellation
    gamma = params_ref[0:1, :Hp]                                      # (1, Hp)
    beta = params_ref[1:2, :Hp]                                       # (1, Hp)
    scale = gamma * jax.lax.rsqrt(var + BN_EPS)
    shift = beta - mean * scale
    h = h * scale + shift                                             # fused affine

    # ---- relu ----
    h = jnp.maximum(h, 0.0)

    # ---- layer2: Linear(hidden -> output), lane-dense output slab ----
    out = jnp.dot(h, w2_ref[...], preferred_element_type=jnp.float32)  # (B, Op)
    o_ref[...] = out + params_ref[2:3, :Op]


def _pad_axis(a, axis, multiple):
    pad = (-a.shape[axis]) % multiple
    if pad == 0:
        return a
    widths = [(0, 0)] * a.ndim
    widths[axis] = (0, pad)
    return jnp.pad(a, widths)


def prepare_params(w1, b1, gamma, beta, w2, b2):
    """One-time (per parameter update) padding + packing. Not on the hot path.

    Returns (w1p, packed_params, w2p):
      w1p: (I, Hp)   -- contraction dim I left unpadded on purpose.
      packed_params: (3, P) with rows [gamma | beta | b2], zero-padded.
      w2p: (Hp, Op)
    Zero padding is exact: padded hidden columns stay identically zero through
    BN/ReLU and padded w2 rows/cols contribute nothing.
    """
    del b1  # redundant: cancelled by train-mode BN mean subtraction
    H = w1.shape[1]
    O = w2.shape[1]
    w1p = _pad_axis(w1.astype(jnp.float32), 1, LANE)                   # (I, Hp)
    w2p = _pad_axis(_pad_axis(w2.astype(jnp.float32), 0, LANE), 1, LANE)
    Hp, Op = w2p.shape
    P = max(Hp, Op)
    packed = jnp.zeros((3, P), jnp.float32)
    packed = packed.at[0, :H].set(gamma.astype(jnp.float32))
    packed = packed.at[1, :H].set(beta.astype(jnp.float32))
    packed = packed.at[2, :O].set(b2.astype(jnp.float32))
    return w1p, packed, w2p


def simple_model_forward(x, w1p, packed_params, w2p, output_size):
    """x: (B, I) unpadded. Pre-padded params from prepare_params(). -> (B, O)."""
    B = x.shape[0]
    Op = w2p.shape[1]

    vmem = pl.BlockSpec(memory_space=pltpu.MemorySpace.VMEM)
    out_padded = pl.pallas_call(
        simple_model_kernel,
        out_shape=jax.ShapeDtypeStruct((B, Op), jnp.float32),
        in_specs=[vmem] * 4,
        out_specs=vmem,
        compiler_params=pltpu.CompilerParams(
            vmem_limit_bytes=32 * 1024 * 1024),
    )(x.astype(jnp.float32), w1p, packed_params, w2p)

    # Slice the lane-dense output slab back down to the true output width.
    return out_padded[:, :output_size]


def reference_forward(x, w1, b1, gamma, beta, w2, b2):
    h = x @ w1 + b1
    mean = jnp.mean(h, axis=0, keepdims=True)
    var = jnp.mean((h - mean) ** 2, axis=0, keepdims=True)
    h = (h - mean) / jnp.sqrt(var + BN_EPS)
    h = h * gamma + beta
    h = jnp.maximum(h, 0.0)
    return h @ w2 + b2


if __name__ == "__main__":
    batch, input_size, hidden_size, output_size = 8, 32, 64, 16

    key = jax.random.PRNGKey(0)
    kx, kw1, kb1, kw2, kb2 = jax.random.split(key, 5)

    x = jax.random.normal(kx, (batch, input_size), dtype=jnp.float32)

    # Deterministic parameter init (PyTorch-style uniform fan-in bounds).
    bound1 = 1.0 / (input_size ** 0.5)
    w1 = jax.random.uniform(kw1, (input_size, hidden_size), jnp.float32,
                            -bound1, bound1)
    b1 = jax.random.uniform(kb1, (hidden_size,), jnp.float32, -bound1, bound1)
    gamma = jnp.ones((hidden_size,), jnp.float32)   # BatchNorm1d weight init
    beta = jnp.zeros((hidden_size,), jnp.float32)   # BatchNorm1d bias init
    bound2 = 1.0 / (hidden_size ** 0.5)
    w2 = jax.random.uniform(kw2, (hidden_size, output_size), jnp.float32,
                            -bound2, bound2)
    b2 = jax.random.uniform(kb2, (output_size,), jnp.float32, -bound2, bound2)

    # One-time parameter preparation (pad + pack), off the per-call hot path.
    w1p, packed_params, w2p = prepare_params(w1, b1, gamma, beta, w2, b2)
    w1p, packed_params, w2p = jax.block_until_ready((w1p, packed_params, w2p))

    out = simple_model_forward(x, w1p, packed_params, w2p, output_size)
    out = jax.block_until_ready(out)

    ref = reference_forward(x, w1, b1, gamma, beta, w2, b2)
    assert out.shape == (batch, output_size)
    assert jnp.allclose(out, ref, atol=1e-4, rtol=1e-4)

    # TODO(synk): nn.BatchNorm1d running_mean/var buffer updates (training
    # side-effect) are not modeled; forward output in train mode doesn't use them.
    print("KERNEL_OK")
</pallas_src>

<mosaic_0001>
module attributes {stable_mosaic.version = 11 : i64} {
  func.func @simple_model_kernel(%arg0: memref<8x32xf32, #tpu.memory_space<vmem>>, %arg1: memref<32x128xf32, #tpu.memory_space<vmem>>, %arg2: memref<3x128xf32, #tpu.memory_space<vmem>>, %arg3: memref<128x128xf32, #tpu.memory_space<vmem>>, %arg4: memref<8x128xf32, #tpu.memory_space<vmem>>) attributes {dimension_semantics = [], scalar_prefetch = 0 : i64, scratch_operands = 0 : i64, tpu.core_type = #tpu.core_type<tc>} {
    %c0 = arith.constant 0 : index
    %c0_0 = arith.constant 0 : index
    %0 = vector.load %arg0[%c0, %c0_0] : memref<8x32xf32, #tpu.memory_space<vmem>>, vector<8x32xf32>
    %c0_1 = arith.constant 0 : index
    %c0_2 = arith.constant 0 : index
    %1 = vector.load %arg1[%c0_1, %c0_2] : memref<32x128xf32, #tpu.memory_space<vmem>>, vector<32x128xf32>
    %cst = arith.constant dense<0.000000e+00> : vector<8x128xf32>
    %2 = tpu.matmul %0, %1, %cst {dimension_numbers = #tpu.dot_dimension_numbers<[1], [0], [0], [1], [0, 0, 1, 1], [], []>} : vector<8x32xf32>, vector<32x128xf32>, vector<8x128xf32> -> vector<8x128xf32>
    %cst_3 = arith.constant dense<0.000000e+00> : vector<128xf32>
    %3 = vector.multi_reduction <add>, %2, %cst_3 [0] : vector<8x128xf32> to vector<128xf32>
    %4 = vector.shape_cast %3 : vector<128xf32> to vector<1x128xf32>
    %5 = arith.mulf %2, %2 : vector<8x128xf32>
    %cst_4 = arith.constant dense<0.000000e+00> : vector<128xf32>
    %6 = vector.multi_reduction <add>, %5, %cst_4 [0] : vector<8x128xf32> to vector<128xf32>
    %7 = vector.shape_cast %6 : vector<128xf32> to vector<1x128xf32>
    %cst_5 = arith.constant 1.250000e-01 : f32
    %8 = vector.broadcast %cst_5 : f32 to vector<1x128xf32>
    %9 = arith.mulf %4, %8 : vector<1x128xf32>
    %cst_6 = arith.constant 1.250000e-01 : f32
    %10 = vector.broadcast %cst_6 : f32 to vector<1x128xf32>
    %11 = arith.mulf %7, %10 : vector<1x128xf32>
    %12 = arith.mulf %9, %9 : vector<1x128xf32>
    %13 = arith.subf %11, %12 : vector<1x128xf32>
    %cst_7 = arith.constant 0.000000e+00 : f32
    %14 = vector.broadcast %cst_7 : f32 to vector<1x128xf32>
    %15 = arith.maximumf %13, %14 : vector<1x128xf32>
    %c0_8 = arith.constant 0 : index
    %c0_9 = arith.constant 0 : index
    %16 = vector.load %arg2[%c0_8, %c0_9] : memref<3x128xf32, #tpu.memory_space<vmem>>, vector<1x128xf32>
    %c1 = arith.constant 1 : index
    %c0_10 = arith.constant 0 : index
    %17 = vector.load %arg2[%c1, %c0_10] : memref<3x128xf32, #tpu.memory_space<vmem>>, vector<1x128xf32>
    %cst_11 = arith.constant 9.99999974E-6 : f32
    %18 = vector.broadcast %cst_11 : f32 to vector<1x128xf32>
    %19 = arith.addf %15, %18 : vector<1x128xf32>
    %20 = math.rsqrt %19 : vector<1x128xf32>
    %21 = arith.mulf %16, %20 : vector<1x128xf32>
    %22 = arith.mulf %9, %21 : vector<1x128xf32>
    %23 = arith.subf %17, %22 : vector<1x128xf32>
    %24 = vector.broadcast %21 : vector<1x128xf32> to vector<8x128xf32>
    %25 = arith.mulf %2, %24 : vector<8x128xf32>
    %26 = vector.broadcast %23 : vector<1x128xf32> to vector<8x128xf32>
    %27 = arith.addf %25, %26 : vector<8x128xf32>
    %cst_12 = arith.constant 0.000000e+00 : f32
    %28 = vector.broadcast %cst_12 : f32 to vector<8x128xf32>
    %29 = arith.maximumf %27, %28 : vector<8x128xf32>
    %c0_13 = arith.constant 0 : index
    %c0_14 = arith.constant 0 : index
    %30 = vector.load %arg3[%c0_13, %c0_14] : memref<128x128xf32, #tpu.memory_space<vmem>>, vector<128x128xf32>
    %cst_15 = arith.constant dense<0.000000e+00> : vector<8x128xf32>
    %31 = tpu.matmul %29, %30, %cst_15 {dimension_numbers = #tpu.dot_dimension_numbers<[1], [0], [0], [1], [0, 0, 1, 1], [], []>} : vector<8x128xf32>, vector<128x128xf32>, vector<8x128xf32> -> vector<8x128xf32>
    %c2 = arith.constant 2 : index
    %c0_16 = arith.constant 0 : index
    %32 = vector.load %arg2[%c2, %c0_16] : memref<3x128xf32, #tpu.memory_space<vmem>>, vector<1x128xf32>
    %33 = vector.broadcast %32 : vector<1x128xf32> to vector<8x128xf32>
    %34 = arith.addf %31, %33 : vector<8x128xf32>
    %c0_17 = arith.constant 0 : index
    %c0_18 = arith.constant 0 : index
    %35 = vector.load %arg4[%c0_17, %c0_18] : memref<8x128xf32, #tpu.memory_space<vmem>>, vector<8x128xf32>
    tpu.vector_store %arg4[%c0_17, %c0_18], %34 {strides = array<i32>} : memref<8x128xf32, #tpu.memory_space<vmem>>, vector<8x128xf32>,
    return
  }
}

</mosaic_0001>

<llo_original>
// kernel: tpu_custom_call.1
$region0: #{tpu_custom_call.1}
  #allocation0 [shape = 'u32[]', space=smem, size = 0x4, offset = 0x4, fixed_abs, tag = 'smem constant byte address 0x4 - core index']
  #allocation1 [shape = 'u32[144,128]{1,0:T(1,128)}', space=vmem, size = 0x12000, scoped, tag = 'internal scratch']
  %s0 = inlined_call_operand.hbm [shape: f32[8,32], index: 0, kind: input, shape index: {}]
  %s1 = inlined_call_operand.hbm [shape: f32[32,128], index: 1, kind: input, shape index: {}]
  %s2 = inlined_call_operand.hbm [shape: f32[3,128], index: 2, kind: input, shape index: {}]
  %s3 = inlined_call_operand.hbm [shape: f32[128,128], index: 3, kind: input, shape index: {}]
  %s4 = inlined_call_operand.hbm [shape: f32[8,128], index: 4, kind: output, shape index: {}]
  %s5 = sld [smem:[#allocation0]]
  $region42: #{tpu_custom_call.1} parent=0
    _
  %s7 = ssub.s32 1, %s5
  %s8 = scalar_select 0, %s7, %s5
  $region1: #{tpu_custom_call.1} parent=0
    #allocation2 [shape = 'u8[4096]{0}', space=vmem, size = 0x1000, scoped, tag = 'input window, operand 0, single buffered']
    #allocation3 [shape = 's32[1]{0}', space=sflag, size = 0x4, scoped, tag = 'scoped memory for tpu_custom_call.1']
    #allocation4 [shape = 's32[1]{0}', space=sflag, size = 0x4, scoped, tag = 'scoped memory for tpu_custom_call.1']
    #allocation5 [shape = 'u8[16384]{0}', space=vmem, size = 0x4000, scoped, tag = 'input window, operand 1, single buffered']
    #allocation6 [shape = 's32[1]{0}', space=sflag, size = 0x4, scoped, tag = 'scoped memory for tpu_custom_call.1']
    #allocation7 [shape = 'u8[2048]{0}', space=vmem, size = 0x800, scoped, tag = 'input window, operand 2, single buffered']
    #allocation8 [shape = 'u8[65536]{0}', space=vmem, size = 0x10000, scoped, tag = 'input window, operand 3, single buffered']
    #allocation9 [shape = 's32[1]{0}', space=sflag, size = 0x4, scoped, tag = 'scoped memory for tpu_custom_call.1']
    #allocation10 [shape = 'u8[4096]{0}', space=vmem, size = 0x1000, scoped, tag = 'output window, operand 0, single buffered']
    %9 = vsyncpa [#allocation3], 0
    %10 = vsyncpa [#allocation6], 0
    %11 = vsyncpa [#allocation9], 0
    %12 = vsyncpa [#allocation4], 0
    // Predicated region
    $region2: #{tpu_custom_call.1} parent=1 // pred_check
      _
    $region3: #{tpu_custom_call.1} parent=1 // pred_check_branch
      %14 = sbr.rel (0) target = $region5
    $region4: #{tpu_custom_call.1} parent=1 // pred_region
      %s16 = ssub.s32 128, 128
      %17 = vsyncadd [#allocation3], %s16
      %s19 = sshll.u32 [#allocation2], 4
      %s20 = int_to_ptr.vmem [resolvable:$true] %s19
      %22 = dma.hbm_to_vmem [thread:$0]  %s0, 128, %s20, [#allocation3]
    $region5: #{tpu_custom_call.1} parent=1 // pred_fallthru
      _
    // Predicated region
    $region6: #{tpu_custom_call.1} parent=1 // pred_check
      _
    $region7: #{tpu_custom_call.1} parent=1 // pred_check_branch
      %24 = sbr.rel (0) target = $region9
    $region8: #{tpu_custom_call.1} parent=1 // pred_region
      %s26 = ssub.s32 512, 512
      %27 = vsyncadd [#allocation6], %s26
      %s28 = sshll.u32 [#allocation5], 4
      %s29 = int_to_ptr.vmem [resolvable:$true] %s28
      %34 = dma.hbm_to_vmem [thread:$0]  %s1, 512, %s29, [#allocation6], 128, 128, 8
    $region9: #{tpu_custom_call.1} parent=1 // pred_fallthru
      _
    // Predicated region
    $region10: #{tpu_custom_call.1} parent=1 // pred_check
      _
    $region11: #{tpu_custom_call.1} parent=1 // pred_check_branch
      %36 = sbr.rel (0) target = $region13
    $region12: #{tpu_custom_call.1} parent=1 // pred_region
      %s38 = ssub.s32 64, 64
      %39 = vsyncadd [#allocation6], %s38
      %s41 = sshll.u32 [#allocation7], 4
      %s42 = int_to_ptr.vmem [resolvable:$true] %s41
      %44 = dma.hbm_to_vmem [thread:$0]  %s2, 64, %s42, [#allocation6]
    $region13: #{tpu_custom_call.1} parent=1 // pred_fallthru
      _
    // Predicated region
    $region14: #{tpu_custom_call.1} parent=1 // pred_check
      _
    $region15: #{tpu_custom_call.1} parent=1 // pred_check_branch
      %46 = sbr.rel (0) target = $region17
    $region16: #{tpu_custom_call.1} parent=1 // pred_region
      %s48 = ssub.s32 2048, 2048
      %49 = vsyncadd [#allocation9], %s48
      %s50 = sshll.u32 [#allocation8], 4
      %s51 = int_to_ptr.vmem [resolvable:$true] %s50
      %56 = dma.hbm_to_vmem [thread:$0]  %s3, 2048, %s51, [#allocation9], 128, 128, 8
    $region17: #{tpu_custom_call.1} parent=1 // pred_fallthru
      _
    // Predicated region
    $region18: #{tpu_custom_call.1} parent=1 // pred_check
      _
    $region19: #{tpu_custom_call.1} parent=1 // pred_check_branch
      %58 = sbr.rel (0) target = $region21
    $region20: #{tpu_custom_call.1} parent=1 // pred_region
      %59 = dma.done [#allocation3], 128
    $region21: #{tpu_custom_call.1} parent=1 // pred_fallthru
      _
    // Predicated region
    $region22: #{tpu_custom_call.1} parent=1 // pred_check
      _
    $region23: #{tpu_custom_call.1} parent=1 // pred_check_branch
      %61 = sbr.rel (0) target = $region25
    $region24: #{tpu_custom_call.1} parent=1 // pred_region
      %62 = dma.done [#allocation6], 512
    $region25: #{tpu_custom_call.1} parent=1 // pred_fallthru
      _
    // Predicated region
    $region26: #{tpu_custom_call.1} parent=1 // pred_check
      _
    $region27: #{tpu_custom_call.1} parent=1 // pred_check_branch
      %64 = sbr.rel (0) target = $region29
    $region28: #{tpu_custom_call.1} parent=1 // pred_region
      %65 = dma.done [#allocation6], 64
    $region29: #{tpu_custom_call.1} parent=1 // pred_fallthru
      _
    // Predicated region
    $region30: #{tpu_custom_call.1} parent=1 // pred_check
      _
    $region31: #{tpu_custom_call.1} parent=1 // pred_check_branch
      %67 = sbr.rel (0) target = $region33
    $region32: #{tpu_custom_call.1} parent=1 // pred_region
      %68 = dma.done [#allocation9], 2048
    $region33: #{tpu_custom_call.1} parent=1 // pred_fallthru
      _
    %v69 = vld [vmem:[#allocation2] sm:$0xff]
    %v70 = vld [vmem:[#allocation5] sm:$0xff]
    %v71 = vld [vmem:[#allocation5 + $0x8] sm:$0xff]
    %v72 = vld [vmem:[#allocation5 + $0x10] sm:$0xff]
    %v73 = vld [vmem:[#allocation5 + $0x18] sm:$0xff]
    %vm74 = vcmask 261120
    %v76 = vsel %vm74, %v69, 0
    %78 = vmatprep.subr.mxu0 0.0
    %79 = vmatpush1.msra.mxu0 0.0
    %80 = vmatprep.subr.mxu0 0.0
    %81 = vmatpush1.msra.mxu0 0.0
    %82 = vmatprep.subr.mxu0 0.0
    %83 = vmatpush1.msra.mxu0 0.0
    %84 = vmatprep.subr.mxu0 0.0
    %85 = vmatpush1.msra.mxu0 0.0
    %86 = vmatprep.subr.mxu0 0.0
    %87 = vmatpush1.msra.mxu0 0.0
    %88 = vmatprep.subr.mxu0 0.0
    %89 = vmatpush1.msra.mxu0 0.0
    %90 = vmatprep.subr.mxu0 0.0
    %91 = vmatpush1.msra.mxu0 0.0
    %92 = vmatprep.subr.mxu0 0.0
    %93 = vmatpush1.msra.mxu0 0.0
    %94 = vmatprep.subr.mxu0 0.0
    %95 = vmatpush1.msra.mxu0 0.0
    %96 = vmatprep.subr.mxu0 0.0
    %97 = vmatpush1.msra.mxu0 0.0
    %98 = vmatprep.subr.mxu0 0.0
    %99 = vmatpush1.msra.mxu0 0.0
    %100 = vmatprep.subr.mxu0 0.0
    %101 = vmatpush1.msra.mxu0 0.0
    %102 = vmatprep.subr.mxu0 0.0
    %103 = vmatpush1.msra.mxu0 %v73
    %104 = vmatprep.subr.mxu0 0.0
    %105 = vmatpush1.msra.mxu0 %v72
    %106 = vmatprep.subr.mxu0 0.0
    %107 = vmatpush1.msra.mxu0 %v71
    %108 = vmatprep.subr.mxu0 0.0
    %109 = vmatpush1.msra.mxu0 %v70
    %110 = vmatprep.subr.mxu0 0.0
    %111 = vmatpush2.msra.mxu0 0.0
    %112 = vmatprep.subr.mxu0 0.0
    %113 = vmatpush2.msra.mxu0 0.0
    %114 = vmatprep.subr.mxu0 0.0
    %115 = vmatpush2.msra.mxu0 0.0
    %116 = vmatprep.subr.mxu0 0.0
    %117 = vmatpush2.msra.mxu0 0.0
    %118 = vmatprep.subr.mxu0 0.0
    %119 = vmatpush2.msra.mxu0 0.0
    %120 = vmatprep.subr.mxu0 0.0
    %121 = vmatpush2.msra.mxu0 0.0
    %122 = vmatprep.subr.mxu0 0.0
    %123 = vmatpush2.msra.mxu0 0.0
    %124 = vmatprep.subr.mxu0 0.0
    %125 = vmatpush2.msra.mxu0 0.0
    %126 = vmatprep.subr.mxu0 0.0
    %127 = vmatpush2.msra.mxu0 0.0
    %128 = vmatprep.subr.mxu0 0.0
    %129 = vmatpush2.msra.mxu0 0.0
    %130 = vmatprep.subr.mxu0 0.0
    %131 = vmatpush2.msra.mxu0 0.0
    %132 = vmatprep.subr.mxu0 0.0
    %133 = vmatpush2.msra.mxu0 0.0
    %134 = vmatprep.subr.mxu0 0.0
    %135 = vmatpush2.msra.mxu0 0.0
    %136 = vmatprep.subr.mxu0 0.0
    %137 = vmatpush2.msra.mxu0 0.0
    %138 = vmatprep.subr.mxu0 0.0
    %139 = vmatpush2.msra.mxu0 0.0
    %140 = vmatprep.subr.mxu0 0.0
    %141 = vmatpush2.msra.mxu0 0.0
    %142 = vmatprep.mubr.f32.mxu0 0.0
    %143 = vmatmul.mubr.f32.gmra.mxu0 %v76
    %v144 = vpop.f32.mrf.mxu0
    %v145 = vadd.f32 0.0, %v144
    %v146 = vpop.f32.mrf.mxu0
    %147 = vdwg.mxu0
    %v148 = vrot.slane %v145, 4
    %v149 = vadd.f32 %v145, %v148
    %v150 = vrot.slane %v149, 2
    %v151 = vadd.f32 %v149, %v150
    %v152 = vrot.slane %v151, 1
    %v153 = vadd.f32 %v151, %v152
    %v154 = vmul.f32 %v145, %v145
    %v155 = vrot.slane %v154, 4
    %v156 = vadd.f32 %v154, %v155
    %v157 = vrot.slane %v156, 2
    %v158 = vadd.f32 %v156, %v157
    %v159 = vrot.slane %v158, 1
    %v160 = vadd.f32 %v158, %v159
    %v161 = vmul.f32 %v153, 0.125
    %v162 = vmul.f32 %v160, 0.125
    %v163 = vmul.f32 %v161, %v161
    %v164 = vsub.f32 %v162, %v163
    %v165 = vmax.f32 %v164, 0.0
    %v166 = vld [vmem:[#allocation7] sm:$0x1]
    %v167 = vld [vmem:[#allocation7 + $0x1] sm:$0x1]
    %v168 = vadd.f32 %v165, 1e-05
    %v169 = vrsqrt.pop %v168
    %v170 = vmul.f32 %v166, %v169
    %v171 = vmul.f32 %v161, %v170
    %v172 = vsub.f32 %v167, %v171
    %v173 = vlaneseq
    %v174 = vshrl.u32 %v173, 7
    %v175 = vsub.s32 0, %v174
    %v176 = vrot.slane %v170, %v175
    %v177 = vmul.f32 %v145, %v176
    %v178 = vlaneseq
    %v179 = vshrl.u32 %v178, 7
    %v180 = vsub.s32 0, %v179
    %v181 = vrot.slane %v172, %v180
    %v182 = vadd.f32 %v177, %v181
    %v183 = vmax.f32 %v182, 0.0
    %v184 = vld [vmem:[#allocation8] sm:$0xff]
    %v185 = vld [vmem:[#allocation8 + $0x8] sm:$0xff]
    %v186 = vld [vmem:[#allocation8 + $0x10] sm:$0xff]
    %v187 = vld [vmem:[#allocation8 + $0x18] sm:$0xff]
    %v188 = vld [vmem:[#allocation8 + $0x20] sm:$0xff]
    %v189 = vld [vmem:[#allocation8 + $0x28] sm:$0xff]
    %v190 = vld [vmem:[#allocation8 + $0x30] sm:$0xff]
    %v191 = vld [vmem:[#allocation8 + $0x38] sm:$0xff]
    %v192 = vld [vmem:[#allocation8 + $0x40] sm:$0xff]
    %v193 = vld [vmem:[#allocation8 + $0x48] sm:$0xff]
    %v194 = vld [vmem:[#allocation8 + $0x50] sm:$0xff]
    %v195 = vld [vmem:[#allocation8 + $0x58] sm:$0xff]
    %v196 = vld [vmem:[#allocation8 + $0x60] sm:$0xff]
    %v197 = vld [vmem:[#allocation8 + $0x68] sm:$0xff]
    %v198 = vld [vmem:[#allocation8 + $0x70] sm:$0xff]
    %v199 = vld [vmem:[#allocation8 + $0x78] sm:$0xff]
    %v200 = vld [vmem:[#allocation7 + $0x2] sm:$0x1]
    %v201 = vlaneseq
    %v202 = vshrl.u32 %v201, 7
    %v203 = vsub.s32 0, %v202
    %v204 = vrot.slane %v200, %v203
    %205 = vmatprep.subr.mxu0 0.0
    %206 = vmatpush1.msra.mxu0 %v199
    %207 = vmatprep.subr.mxu0 0.0
    %208 = vmatpush1.msra.mxu0 %v198
    %209 = vmatprep.subr.mxu0 0.0
    %210 = vmatpush1.msra.mxu0 %v197
    %211 = vmatprep.subr.mxu0 0.0
    %212 = vmatpush1.msra.mxu0 %v196
    %213 = vmatprep.subr.mxu0 0.0
    %214 = vmatpush1.msra.mxu0 %v195
    %215 = vmatprep.subr.mxu0 0.0
    %216 = vmatpush1.msra.mxu0 %v194
    %217 = vmatprep.subr.mxu0 0.0
    %218 = vmatpush1.msra.mxu0 %v193
    %219 = vmatprep.subr.mxu0 0.0
    %220 = vmatpush1.msra.mxu0 %v192
    %221 = vmatprep.subr.mxu0 0.0
    %222 = vmatpush1.msra.mxu0 %v191
    %223 = vmatprep.subr.mxu0 0.0
    %224 = vmatpush1.msra.mxu0 %v190
    %225 = vmatprep.subr.mxu0 0.0
    %226 = vmatpush1.msra.mxu0 %v189
    %227 = vmatprep.subr.mxu0 0.0
    %228 = vmatpush1.msra.mxu0 %v188
    %229 = vmatprep.subr.mxu0 0.0
    %230 = vmatpush1.msra.mxu0 %v187
    %231 = vmatprep.subr.mxu0 0.0
    %232 = vmatpush1.msra.mxu0 %v186
    %233 = vmatprep.subr.mxu0 0.0
    %234 = vmatpush1.msra.mxu0 %v185
    %235 = vmatprep.subr.mxu0 0.0
    %236 = vmatpush1.msra.mxu0 %v184
    %237 = vmatprep.subr.mxu0 0.0
    %238 = vmatpush2.msra.mxu0 0.0
    %239 = vmatprep.subr.mxu0 0.0
    %240 = vmatpush2.msra.mxu0 0.0
    %241 = vmatprep.subr.mxu0 0.0
    %242 = vmatpush2.msra.mxu0 0.0
    %243 = vmatprep.subr.mxu0 0.0
    %244 = vmatpush2.msra.mxu0 0.0
    %245 = vmatprep.subr.mxu0 0.0
    %246 = vmatpush2.msra.mxu0 0.0
    %247 = vmatprep.subr.mxu0 0.0
    %248 = vmatpush2.msra.mxu0 0.0
    %249 = vmatprep.subr.mxu0 0.0
    %250 = vmatpush2.msra.mxu0 0.0
    %251 = vmatprep.subr.mxu0 0.0
    %252 = vmatpush2.msra.mxu0 0.0
    %253 = vmatprep.subr.mxu0 0.0
    %254 = vmatpush2.msra.mxu0 0.0
    %255 = vmatprep.subr.mxu0 0.0
    %256 = vmatpush2.msra.mxu0 0.0
    %257 = vmatprep.subr.mxu0 0.0
    %258 = vmatpush2.msra.mxu0 0.0
    %259 = vmatprep.subr.mxu0 0.0
    %260 = vmatpush2.msra.mxu0 0.0
    %261 = vmatprep.subr.mxu0 0.0
    %262 = vmatpush2.msra.mxu0 0.0
    %263 = vmatprep.subr.mxu0 0.0
    %264 = vmatpush2.msra.mxu0 0.0
    %265 = vmatprep.subr.mxu0 0.0
    %266 = vmatpush2.msra.mxu0 0.0
    %267 = vmatprep.subr.mxu0 0.0
    %268 = vmatpush2.msra.mxu0 0.0
    %269 = vmatprep.mubr.f32.mxu0 0.0
    %270 = vmatmul.mubr.f32.gmra.mxu0 %v183
    %v271 = vpop.f32.mrf.mxu0
    %v272 = vadd.f32 %v204, %v271
    %v273 = vpop.f32.mrf.mxu0
    %274 = vdwg.mxu0
    %275 = vst [vmem:[#allocation10] sm:$0xff] %v272
    // Predicated region
    $region34: #{tpu_custom_call.1} parent=1 // pred_check
      _
    $region35: #{tpu_custom_call.1} parent=1 // pred_check_branch
      %277 = sbr.rel (0) target = $region37
    $region36: #{tpu_custom_call.1} parent=1 // pred_region
      %s279 = ssub.s32 128, 128
      %280 = vsyncadd [#allocation4], %s279
      %s282 = sshll.u32 [#allocation10], 4
      %s283 = int_to_ptr.vmem [resolvable:$true] %s282
      %285 = dma.vmem_to_hbm [thread:$0]  %s283, 128, %s4, [#allocation4]
    $region37: #{tpu_custom_call.1} parent=1 // pred_fallthru
      _
    // Predicated region
    $region38: #{tpu_custom_call.1} parent=1 // pred_check
      _
    $region39: #{tpu_custom_call.1} parent=1 // pred_check_branch
      %287 = sbr.rel (0) target = $region41
    $region40: #{tpu_custom_call.1} parent=1 // pred_region
      %288 = dma.done [#allocation4], 128
    $region41: #{tpu_custom_call.1} parent=1 // pred_fallthru
      _
    %289 = vsyncpa [#allocation3], 1
    %290 = vsyncpa [#allocation6], 1
    %291 = vsyncpa [#allocation9], 1
    %292 = vsyncpa [#allocation4], 1

</llo_original>
